<compile_context>
chip_gen: v7x
topology: tpu7x:2x2x1
jax: 0.10.0
libtpu: 0.0.40
codegen_flags: <defaults>
</compile_context>

<pallas_src>
import math

import jax
import jax.numpy as jnp
from jax.experimental import pallas as pl
from jax.experimental.pallas import tpu as pltpu


# ---------------------------------------------------------------------------
# Kernel
# ---------------------------------------------------------------------------

def _ensemble_kernel(w_ref, f_ref, x_ref, o_ref, soft_ref):
    """One (oi, bi) grid step.

    w_ref    : (M, TO)     weight tile (native dtype)
    f_ref    : (1, TO)     factor tile (native dtype)
    x_ref    : (TB, M, TO) X tile (native dtype, streamed from HBM)
    o_ref    : (TB, TO)    output tile (float32)
    soft_ref : (M, TO)     VMEM scratch: softmax(weight, axis=0) * factor (f32),
                           recomputed only when the output-column tile changes.
    """
    # bi is the inner (fastest) grid axis -> recompute the per-column softmax
    # once per output tile, not once per batch tile.
    @pl.when(pl.program_id(1) == 0)
    def _():
        w = w_ref[...].astype(jnp.float32)                 # (M, TO)
        w_max = jnp.max(w, axis=0, keepdims=True)          # (1, TO)
        e = jnp.exp(w - w_max)                             # (M, TO)
        denom = jnp.sum(e, axis=0, keepdims=True)          # (1, TO)
        # Exact division keeps the 1e-5 tolerance; factor folded into soft.
        soft_ref[...] = (e / denom) * f_ref[...].astype(jnp.float32)

    s = soft_ref[...]                                      # (M, TO) f32
    num_models = x_ref.shape[1]

    if num_models <= 16:
        # Small ensembles: unrolled VPU accumulate over the model axis
        # (no (TB, M, TO) f32 temp, no cross-sublane reduce). Native-dtype X is
        # cast to f32 per slice; accumulation stays in f32.
        acc = x_ref[:, 0, :].astype(jnp.float32) * s[0:1, :]
        for m in range(1, num_models):
            acc = acc + x_ref[:, m, :].astype(jnp.float32) * s[m:m + 1, :]
    else:
        # Larger ensembles: broadcast-multiply + sublane reduce keeps the traced
        # program small (the kernel is HBM-bound either way).
        acc = jnp.sum(x_ref[...].astype(jnp.float32) * s[None, :, :], axis=1)

    o_ref[...] = acc.astype(o_ref.dtype)


# ---------------------------------------------------------------------------
# Tile selection / wrapper
# ---------------------------------------------------------------------------

def _round_up(x, m):
    return (x + m - 1) // m * m


def _vmem_capacity_bytes(default=64 * 1024 * 1024):
    """Physical VMEM of the attached TPU (falls back to a v7x-safe 64 MiB)."""
    try:
        cap = getattr(pltpu.get_tpu_info(), "vmem_capacity_bytes", None)
        if cap:
            return int(cap)
    except Exception:
        pass
    return default


def _choose_tiles(B, M, O, budget_bytes):
    """Pick (TB, TO).

    Every block's trailing dims are either the full array extent (always legal)
    or an (8, 128)-multiple; non-dividing trailing tiles are handled by the
    Pallas pipeline's masking, so X never needs physical padding in HBM.
    """
    m_pad = _round_up(M, 8)  # sublane padding of the (M, TO) plane in VMEM

    def working_set(tb, to):
        x_blk = tb * m_pad * to * 4      # conservative (covers bf16 packing too)
        w_blk = m_pad * to * 4
        f_blk = 8 * to * 4
        o_blk = tb * to * 4
        # inputs/outputs are double-buffered by the pipeline; + single scratch.
        return 2 * (x_blk + w_blk + f_blk + o_blk) + m_pad * to * 4

    # Lane tile: full O when modest, else a wide multiple of 128.
    TO = O if O <= 2048 else 2048
    # Batch tile: full B when modest, else a multiple of 8.
    TB = B if B <= 256 else 256

    # Shrink the batch tile first: keep TO wide (>=512 where possible) so X DMA
    # rows stay long and output stores stay unmasked, lane-dense `vst`.
    while working_set(TB, TO) > budget_bytes and TB > 8:
        TB = max(8, _round_up(TB // 2, 8))
    while working_set(TB, TO) > budget_bytes and TO > 128:
        TO = max(128, _round_up(TO // 2, 128))

    return TB, TO


def linear_ensemble_forward(x, weight, factor, *, vmem_budget_bytes=None):
    """x: (B, M, O) any float dtype, weight: (M, O), factor: (O,) -> (B, O) f32."""
    B, M, O = x.shape
    assert weight.shape == (M, O)
    assert factor.shape == (O,)

    cap = _vmem_capacity_bytes()
    if vmem_budget_bytes is None:
        # ~65% of physical VMEM, capped at 64 MiB:
        #   v5e / v6e (128 MiB physical) -> 64 MiB; v7x (64 MiB per TC) -> ~41 MiB.
        vmem_budget_bytes = min(int(cap * 0.65), 64 * 1024 * 1024)
    vmem_limit = max(32 * 1024 * 1024,
                     min(int(cap * 0.85), vmem_budget_bytes + (16 << 20)))

    TB, TO = _choose_tiles(B, M, O, vmem_budget_bytes)

    # oi outer / bi inner: the weight & factor tiles depend only on oi, so their
    # DMAs are elided across the entire inner batch sweep.
    grid = (pl.cdiv(O, TO), pl.cdiv(B, TB))

    factor2d = factor.reshape(1, O)          # metadata-only reshape

    out = pl.pallas_call(
        _ensemble_kernel,
        out_shape=jax.ShapeDtypeStruct((B, O), jnp.float32),
        grid=grid,
        in_specs=[
            pl.BlockSpec((M, TO), lambda oi, bi: (0, oi)),           # weight
            pl.BlockSpec((1, TO), lambda oi, bi: (0, oi)),           # factor
            pl.BlockSpec((TB, M, TO), lambda oi, bi: (bi, 0, oi)),   # X (native dtype)
        ],
        out_specs=pl.BlockSpec((TB, TO), lambda oi, bi: (bi, oi)),
        scratch_shapes=[pltpu.VMEM((M, TO), jnp.float32)],           # soft scratch
        compiler_params=pltpu.CompilerParams(
            # oi may be sharded across TensorCores (v7x megacore); bi must stay
            # on one core because the soft scratch is carried across it.
            dimension_semantics=("parallel", "arbitrary"),
            vmem_limit_bytes=vmem_limit,
        ),
    )(weight, factor2d, x)

    return out


def reference_forward(x, weight, factor):
    """Pure-JAX reference mirroring the PyTorch forward."""
    soft = jax.nn.softmax(weight.astype(jnp.float32), axis=0)
    return factor.astype(jnp.float32)[None, :] * jnp.sum(
        x.astype(jnp.float32) * soft[None, :, :], axis=1)


# ---------------------------------------------------------------------------
# Self-test
# ---------------------------------------------------------------------------

if __name__ == "__main__":
    # Shapes implied by LinearNetwork(model_num, output_num) applied to a batch.
    batch, model_num, output_num = 2, 4, 16

    key = jax.random.PRNGKey(0)
    kx, kw = jax.random.split(key)

    # Parameter init matching the PyTorch __init__:
    #   weight ~ U(-stdv, stdv) with stdv = 1/sqrt(model_num); factor = 1.
    stdv = 1.0 / math.sqrt(model_num)
    weight = jax.random.uniform(
        kw, (model_num, output_num), dtype=jnp.float32, minval=-stdv, maxval=stdv)
    factor = jnp.ones((output_num,), dtype=jnp.float32)
    x = jax.random.normal(kx, (batch, model_num, output_num), dtype=jnp.float32)

    out = jax.block_until_ready(linear_ensemble_forward(x, weight, factor))
    ref = reference_forward(x, weight, factor)
    assert out.shape == (batch, output_num)
    assert jnp.allclose(out, ref, atol=1e-5, rtol=1e-5), "mismatch vs reference (f32)"

    # Second small case: odd (non-8/128-multiple) extents + bf16 X streamed in
    # its native dtype (f32 accumulation inside the kernel).
    b2, m2, o2 = 5, 3, 24
    k1, k2 = jax.random.split(jax.random.PRNGKey(0))
    stdv2 = 1.0 / math.sqrt(m2)
    w2 = jax.random.uniform(k1, (m2, o2), dtype=jnp.float32, minval=-stdv2, maxval=stdv2)
    f2 = jnp.ones((o2,), dtype=jnp.float32)
    x2 = jax.random.normal(k2, (b2, m2, o2), dtype=jnp.float32).astype(jnp.bfloat16)

    out2 = jax.block_until_ready(linear_ensemble_forward(x2, w2, f2))
    ref2 = reference_forward(x2, w2, f2)
    assert out2.shape == (b2, o2)
    assert jnp.allclose(out2, ref2, atol=1e-5, rtol=1e-5), "mismatch vs reference (bf16)"

    print("KERNEL_OK")
</pallas_src>

<mosaic_0001>
module attributes {stable_mosaic.version = 11 : i64} {
  func.func @_ensemble_kernel(%arg0: i32, %arg1: i32, %arg2: memref<4x16xf32, #tpu.memory_space<vmem>>, %arg3: memref<1x16xf32, #tpu.memory_space<vmem>>, %arg4: memref<2x4x16xf32, #tpu.memory_space<vmem>>, %arg5: memref<2x16xf32, #tpu.memory_space<vmem>>, %arg6: memref<4x16xf32, #tpu.memory_space<vmem>>) attributes {dimension_semantics = [#tpu.dimension_semantics<parallel>, #tpu.dimension_semantics<arbitrary>], iteration_bounds = array<i64: 1, 1>, scalar_prefetch = 0 : i64, scratch_operands = 1 : i64, tpu.core_type = #tpu.core_type<tc>, window_params = [{transform_indices = @transform_0, window_bounds = array<i64: 4, 16>}, {transform_indices = @transform_1, window_bounds = array<i64: 1, 16>}, {transform_indices = @transform_2, window_bounds = array<i64: 2, 4, 16>}, {transform_indices = @transform_3, window_bounds = array<i64: 2, 16>}]} {
    %c0_i32 = arith.constant 0 : i32
    %0 = arith.cmpi eq, %arg1, %c0_i32 : i32
    %1 = arith.extui %0 : i1 to i32
    %c0_i32_0 = arith.constant 0 : i32
    %2 = arith.cmpi ne, %1, %c0_i32_0 : i32
    scf.if %2 {
      %c0_13 = arith.constant 0 : index
      %c0_14 = arith.constant 0 : index
      %28 = vector.load %arg2[%c0_13, %c0_14] : memref<4x16xf32, #tpu.memory_space<vmem>>, vector<4x16xf32>
      %cst = arith.constant dense<0xFF800000> : vector<16xf32>
      %29 = vector.multi_reduction <maximumf>, %28, %cst [0] : vector<4x16xf32> to vector<16xf32>
      %30 = vector.shape_cast %29 : vector<16xf32> to vector<1x16xf32>
      %31 = vector.broadcast %30 : vector<1x16xf32> to vector<4x16xf32>
      %32 = arith.subf %28, %31 : vector<4x16xf32>
      %33 = math.exp %32 : vector<4x16xf32>
      %cst_15 = arith.constant dense<0.000000e+00> : vector<16xf32>
      %34 = vector.multi_reduction <add>, %33, %cst_15 [0] : vector<4x16xf32> to vector<16xf32>
      %35 = vector.shape_cast %34 : vector<16xf32> to vector<1x16xf32>
      %36 = vector.broadcast %35 : vector<1x16xf32> to vector<4x16xf32>
      %37 = arith.divf %33, %36 : vector<4x16xf32>
      %c0_16 = arith.constant 0 : index
      %c0_17 = arith.constant 0 : index
      %38 = vector.load %arg3[%c0_16, %c0_17] : memref<1x16xf32, #tpu.memory_space<vmem>>, vector<1x16xf32>
      %39 = vector.broadcast %38 : vector<1x16xf32> to vector<4x16xf32>
      %40 = arith.mulf %37, %39 : vector<4x16xf32>
      %c0_18 = arith.constant 0 : index
      %c0_19 = arith.constant 0 : index
      %41 = vector.load %arg6[%c0_18, %c0_19] : memref<4x16xf32, #tpu.memory_space<vmem>>, vector<4x16xf32>
      tpu.vector_store %arg6[%c0_18, %c0_19], %40 {strides = array<i32>} : memref<4x16xf32, #tpu.memory_space<vmem>>, vector<4x16xf32>,
    } else {
    }
    %c0 = arith.constant 0 : index
    %c0_1 = arith.constant 0 : index
    %3 = vector.load %arg6[%c0, %c0_1] : memref<4x16xf32, #tpu.memory_space<vmem>>, vector<4x16xf32>
    %c0_2 = arith.constant 0 : index
    %c0_3 = arith.constant 0 : index
    %c0_4 = arith.constant 0 : index
    %4 = vector.load %arg4[%c0_2, %c0_3, %c0_4] : memref<2x4x16xf32, #tpu.memory_space<vmem>>, vector<2x1x16xf32>
    %5 = vector.shape_cast %4 : vector<2x1x16xf32> to vector<2x16xf32>
    %6 = vector.extract_strided_slice %3 {offsets = [0, 0], sizes = [1, 16], strides = [1, 1]} : vector<4x16xf32> to vector<1x16xf32>
    %7 = vector.broadcast %6 : vector<1x16xf32> to vector<2x16xf32>
    %8 = arith.mulf %5, %7 : vector<2x16xf32>
    %c0_5 = arith.constant 0 : index
    %c1 = arith.constant 1 : index
    %c0_6 = arith.constant 0 : index
    %9 = vector.load %arg4[%c0_5, %c1, %c0_6] : memref<2x4x16xf32, #tpu.memory_space<vmem>>, vector<2x1x16xf32>
    %10 = vector.shape_cast %9 : vector<2x1x16xf32> to vector<2x16xf32>
    %11 = vector.extract_strided_slice %3 {offsets = [1, 0], sizes = [1, 16], strides = [1, 1]} : vector<4x16xf32> to vector<1x16xf32>
    %12 = vector.broadcast %11 : vector<1x16xf32> to vector<2x16xf32>
    %13 = arith.mulf %10, %12 : vector<2x16xf32>
    %14 = arith.addf %8, %13 : vector<2x16xf32>
    %c0_7 = arith.constant 0 : index
    %c2 = arith.constant 2 : index
    %c0_8 = arith.constant 0 : index
    %15 = vector.load %arg4[%c0_7, %c2, %c0_8] : memref<2x4x16xf32, #tpu.memory_space<vmem>>, vector<2x1x16xf32>
    %16 = vector.shape_cast %15 : vector<2x1x16xf32> to vector<2x16xf32>
    %17 = vector.extract_strided_slice %3 {offsets = [2, 0], sizes = [1, 16], strides = [1, 1]} : vector<4x16xf32> to vector<1x16xf32>
    %18 = vector.broadcast %17 : vector<1x16xf32> to vector<2x16xf32>
    %19 = arith.mulf %16, %18 : vector<2x16xf32>
    %20 = arith.addf %14, %19 : vector<2x16xf32>
    %c0_9 = arith.constant 0 : index
    %c3 = arith.constant 3 : index
    %c0_10 = arith.constant 0 : index
    %21 = vector.load %arg4[%c0_9, %c3, %c0_10] : memref<2x4x16xf32, #tpu.memory_space<vmem>>, vector<2x1x16xf32>
    %22 = vector.shape_cast %21 : vector<2x1x16xf32> to vector<2x16xf32>
    %23 = vector.extract_strided_slice %3 {offsets = [3, 0], sizes = [1, 16], strides = [1, 1]} : vector<4x16xf32> to vector<1x16xf32>
    %24 = vector.broadcast %23 : vector<1x16xf32> to vector<2x16xf32>
    %25 = arith.mulf %22, %24 : vector<2x16xf32>
    %26 = arith.addf %20, %25 : vector<2x16xf32>
    %c0_11 = arith.constant 0 : index
    %c0_12 = arith.constant 0 : index
    %27 = vector.load %arg5[%c0_11, %c0_12] : memref<2x16xf32, #tpu.memory_space<vmem>>, vector<2x16xf32>
    tpu.vector_store %arg5[%c0_11, %c0_12], %26 {strides = array<i32>} : memref<2x16xf32, #tpu.memory_space<vmem>>, vector<2x16xf32>,
    return
  }
  func.func @transform_0(%arg0: i32, %arg1: i32) -> (i32, i32) {
    %c0_i32 = arith.constant 0 : i32
    %c0_i32_0 = arith.constant 0 : i32
    return %c0_i32, %arg0 : i32, i32
  }
  func.func @transform_1(%arg0: i32, %arg1: i32) -> (i32, i32) {
    %c0_i32 = arith.constant 0 : i32
    %c0_i32_0 = arith.constant 0 : i32
    return %c0_i32, %arg0 : i32, i32
  }
  func.func @transform_2(%arg0: i32, %arg1: i32) -> (i32, i32, i32) {
    %c0_i32 = arith.constant 0 : i32
    %c0_i32_0 = arith.constant 0 : i32
    return %arg1, %c0_i32, %arg0 : i32, i32, i32
  }
  func.func @transform_3(%arg0: i32, %arg1: i32) -> (i32, i32) {
    %c0_i32 = arith.constant 0 : i32
    return %arg1, %arg0 : i32, i32
  }
}

</mosaic_0001>

<llo_original>
// kernel: tpu_custom_call.1
$region0: #{tpu_custom_call.1}
  #allocation0 [shape = 'u32[]', space=smem, size = 0x4, offset = 0x4, fixed_abs, tag = 'smem constant byte address 0x4 - core index']
  #allocation1 [shape = 'u32[144,128]{1,0:T(1,128)}', space=vmem, size = 0x12000, scoped, tag = 'internal scratch']
  #allocation2 [shape = 'f32[4,16]{1,0:T(4,128)}', space=vmem, size = 0x800, scoped, tag = 'scratch operand']
  %s0 = inlined_call_operand.hbm [shape: f32[4,16], index: 0, kind: input, shape index: {}]
  %s1 = inlined_call_operand.vmem [shape: f32[1,16], index: 1, kind: input, shape index: {}]
  %s2 = inlined_call_operand.hbm [shape: f32[2,4,16], index: 2, kind: input, shape index: {}]
  %s3 = inlined_call_operand.hbm [shape: f32[2,16], index: 3, kind: output, shape index: {}]
  %s4 = sld [smem:[#allocation0]]
  $region34: #{tpu_custom_call.1} parent=0
    _
  %s6 = ssub.s32 1, %s4
  %s7 = scalar_select 0, %s6, %s4
  $region1: #{tpu_custom_call.1} parent=0
    #allocation3 [shape = 'u8[2048]{0}', space=vmem, size = 0x800, scoped, tag = 'input window, operand 0, single buffered']
    #allocation4 [shape = 's32[1]{0}', space=sflag, size = 0x4, scoped, tag = 'scoped memory for tpu_custom_call.1']
    #allocation5 [shape = 's32[1]{0}', space=sflag, size = 0x4, scoped, tag = 'scoped memory for tpu_custom_call.1']
    #allocation6 [shape = 'u8[4096]{0}', space=vmem, size = 0x1000, scoped, tag = 'input window, operand 2, single buffered']
    #allocation7 [shape = 's32[1]{0}', space=sflag, size = 0x4, scoped, tag = 'scoped memory for tpu_custom_call.1']
    #allocation8 [shape = 'u8[1024]{0}', space=vmem, size = 0x400, scoped, tag = 'output window, operand 0, single buffered']
    %8 = vsyncpa [#allocation4], 0
    %9 = vsyncpa [#allocation7], 0
    %10 = vsyncpa [#allocation5], 0
    // Predicated region
    $region2: #{tpu_custom_call.1} parent=1 // pred_check
      _
    $region3: #{tpu_custom_call.1} parent=1 // pred_check_branch
      %12 = sbr.rel (0) target = $region5
    $region4: #{tpu_custom_call.1} parent=1 // pred_region
      %s14 = ssub.s32 64, 64
      %15 = vsyncadd [#allocation4], %s14
      %s17 = sshll.u32 [#allocation3], 4
      %s18 = int_to_ptr.vmem [resolvable:$true] %s17
      %20 = dma.hbm_to_vmem [thread:$0]  %s0, 64, %s18, [#allocation4]
    $region5: #{tpu_custom_call.1} parent=1 // pred_fallthru
      _
    // Predicated region
    $region6: #{tpu_custom_call.1} parent=1 // pred_check
      _
    $region7: #{tpu_custom_call.1} parent=1 // pred_check_branch
      %22 = sbr.rel (0) target = $region9
    $region8: #{tpu_custom_call.1} parent=1 // pred_region
      _
    $region9: #{tpu_custom_call.1} parent=1 // pred_fallthru
      _
    // Predicated region
    $region10: #{tpu_custom_call.1} parent=1 // pred_check
      _
    $region11: #{tpu_custom_call.1} parent=1 // pred_check_branch
      %24 = sbr.rel (0) target = $region13
    $region12: #{tpu_custom_call.1} parent=1 // pred_region
      %s26 = ssub.s32 128, 128
      %27 = vsyncadd [#allocation7], %s26
      %s28 = sshll.u32 [#allocation6], 4
      %s29 = int_to_ptr.vmem [resolvable:$true] %s28
      %34 = dma.hbm_to_vmem [thread:$0]  %s2, 128, %s29, [#allocation7], 64, 64, 4
    $region13: #{tpu_custom_call.1} parent=1 // pred_fallthru
      _
    // Predicated region
    $region14: #{tpu_custom_call.1} parent=1 // pred_check
      _
    $region15: #{tpu_custom_call.1} parent=1 // pred_check_branch
      %36 = sbr.rel (0) target = $region17
    $region16: #{tpu_custom_call.1} parent=1 // pred_region
      %37 = dma.done [#allocation4], 64
    $region17: #{tpu_custom_call.1} parent=1 // pred_fallthru
      _
    // Predicated region
    $region18: #{tpu_custom_call.1} parent=1 // pred_check
      _
    $region19: #{tpu_custom_call.1} parent=1 // pred_check_branch
      %39 = sbr.rel (0) target = $region21
    $region20: #{tpu_custom_call.1} parent=1 // pred_region
      %40 = dma.done [#allocation7], 128
    $region21: #{tpu_custom_call.1} parent=1 // pred_fallthru
      _
    %p41 = scmp.eq.s32.totalorder 0, 0
    // Predicated region
    $region22: #{tpu_custom_call.1} parent=1 // pred_check
      %p42 = pneg %p41
    $region23: #{tpu_custom_call.1} parent=1 // pred_check_branch
      %44 = sbr.rel (%p42) target = $region25
    $region24: #{tpu_custom_call.1} parent=1 // pred_region
      %v45 = vld [vmem:[#allocation3] sm:$0xf]
      %vm46 = vcmask 125952
      %v47 = vsel %vm46, %v45, -inf
      %v48 = vrot.slane %v47, 4
      %v49 = vmax.f32 %v47, %v48
      %v50 = vrot.slane %v49, 2
      %v51 = vmax.f32 %v49, %v50
      %v52 = vrot.slane %v51, 1
      %v53 = vmax.f32 %v51, %v52
      %v54 = vsub.f32 %v45, %v53
      %v55 = vmul.f32 %v54, 1.442695
      %v56 = vpow.pop %v55
      %v57 = vsel %vm46, %v56, 0.0
      %v58 = vrot.slane %v57, 4
      %v59 = vadd.f32 %v57, %v58
      %v60 = vrot.slane %v59, 2
      %v61 = vadd.f32 %v59, %v60
      %v62 = vrot.slane %v61, 1
      %v63 = vadd.f32 %v61, %v62
      %v64 = vrcp.pop %v63
      %v65 = vmul.f32 %v56, %v64
      %v66 = vld [vmem:[%s1] sm:$0x1]
      %v68 = vlaneseq
      %v69 = vshrl.u32 %v68, 7
      %v70 = vsub.s32 0, %v69
      %v71 = vrot.slane %v66, %v70
      %v73 = vmul.f32 %v65, %v71
      %74 = vst.msk [vmem:[#allocation2] sm:$0xf] %vm46, %v73
    $region25: #{tpu_custom_call.1} parent=1 // pred_fallthru
      _
    %v75 = vld [vmem:[#allocation2] sm:$0xf]
    %v76 = vld [vmem:[#allocation6] sm:$0x1]
    %v77 = vld [vmem:[#allocation6 + $0x4] sm:$0x1]
    %v78 = vlaneseq
    %v79 = vshrl.u32 %v78, 7
    %v80 = vsub.s32 0, %v79
    %v81 = vrot.slane %v75, %v80
    %v82 = vmul.f32 %v76, %v81
    %v83 = vmul.f32 %v77, %v81
    %v84 = vld [vmem:[#allocation6 + $0x1] sm:$0x1]
    %v85 = vld [vmem:[#allocation6 + $0x5] sm:$0x1]
    %v86 = vlaneseq
    %v87 = vshrl.u32 %v86, 7
    %v88 = vsub.s32 1, %v87
    %v89 = vrot.slane %v75, %v88
    %v90 = vmul.f32 %v84, %v89
    %v91 = vmul.f32 %v85, %v89
    %v92 = vadd.f32 %v82, %v90
    %v93 = vadd.f32 %v83, %v91
    %v94 = vld [vmem:[#allocation6 + $0x2] sm:$0x1]
    %v95 = vld [vmem:[#allocation6 + $0x6] sm:$0x1]
    %v96 = vlaneseq
    %v97 = vshrl.u32 %v96, 7
    %v98 = vsub.s32 2, %v97
    %v99 = vrot.slane %v75, %v98
    %v100 = vmul.f32 %v94, %v99
    %v101 = vmul.f32 %v95, %v99
    %v102 = vadd.f32 %v92, %v100
    %v103 = vadd.f32 %v93, %v101
    %v104 = vld [vmem:[#allocation6 + $0x3] sm:$0x1]
    %v105 = vld [vmem:[#allocation6 + $0x7] sm:$0x1]
    %v106 = vlaneseq
    %v107 = vshrl.u32 %v106, 7
    %v108 = vsub.s32 3, %v107
    %v109 = vrot.slane %v75, %v108
    %v110 = vmul.f32 %v104, %v109
    %v111 = vmul.f32 %v105, %v109
    %v112 = vadd.f32 %v102, %v110
    %v113 = vadd.f32 %v103, %v111
    %v116 = vrot.slane %v113, 7
    %vm117 = vcmask 1041409
    %v118 = vsel %vm117, %v116, %v112
    %vm120 = vcmask 123904
    %121 = vst.msk [vmem:[#allocation8] sm:$0x3] %vm120, %v118
    // Predicated region
    $region26: #{tpu_custom_call.1} parent=1 // pred_check
      _
    $region27: #{tpu_custom_call.1} parent=1 // pred_check_branch
      %123 = sbr.rel (0) target = $region29
    $region28: #{tpu_custom_call.1} parent=1 // pred_region
      %s125 = ssub.s32 32, 32
      %126 = vsyncadd [#allocation5], %s125
      %s128 = sshll.u32 [#allocation8], 4
      %s129 = int_to_ptr.vmem [resolvable:$true] %s128
      %131 = dma.vmem_to_hbm [thread:$0]  %s129, 32, %s3, [#allocation5]
    $region29: #{tpu_custom_call.1} parent=1 // pred_fallthru
      _
    // Predicated region
    $region30: #{tpu_custom_call.1} parent=1 // pred_check
      _
    $region31: #{tpu_custom_call.1} parent=1 // pred_check_branch
      %133 = sbr.rel (0) target = $region33
    $region32: #{tpu_custom_call.1} parent=1 // pred_region
      %134 = dma.done [#allocation5], 32
    $region33: #{tpu_custom_call.1} parent=1 // pred_fallthru
      _
    %135 = vsyncpa [#allocation4], 1
    %136 = vsyncpa [#allocation7], 1
    %137 = vsyncpa [#allocation5], 1

</llo_original>
